<compile_context>
chip_gen: v7x
topology: tpu7x:2x2x1
jax: 0.10.0
libtpu: 0.0.40
codegen_flags: <defaults>
</compile_context>

<pallas_src>
import math

import jax
import jax.numpy as jnp
from jax.experimental import pallas as pl
from jax.experimental.pallas import tpu as pltpu


_LANE = 128
_SUBLANE = 8
_MAX_TN = 4096                 # lanes per tile when column-tiling very large H
_MAX_REPACK_LANES = 2048       # largest lcm(H, 128) we are willing to repack to
_MIB = 1024 * 1024


def _chip_flavor():
    """Best-effort TPU generation detection; conservative defaults on failure."""
    try:
        kind = jax.devices()[0].device_kind.lower()
    except Exception:
        kind = ""
    is_v5e = ("v5 lite" in kind) or ("v5e" in kind) or ("v5litepod" in kind)
    # v7x has 64 MiB VMEM per TensorCore; v4/v5/v6 have 128 MiB.
    is_small_vmem = "7" in kind
    return is_v5e, is_small_vmem


def _scale_offset_kernel(x_ref, w_ref, b_ref, o_ref):
    # Pure VPU elementwise: y = x * gamma + beta (params broadcast over rows).
    y = x_ref[...] * w_ref[...] + b_ref[...]
    o_ref[...] = y.astype(o_ref.dtype)


def scale_offset(x, weight, bias):
    """Applies y = x * weight + bias along the last dimension.

    x:      (..., H)
    weight: (H,)
    bias:   (H,)
    """
    orig_shape = x.shape
    H = orig_shape[-1]
    dsize = jnp.dtype(x.dtype).itemsize

    is_v5e, is_small_vmem = _chip_flavor()
    # Bigger blocks on 128-MiB-VMEM parts; stay conservative on v7x (64 MiB/TC).
    block_budget = (4 * _MIB) if is_small_vmem else (8 * _MIB)

    # Param dtype: bf16-capable VPUs (v6e/v7x) keep packed bf16 FMA when x is
    # bf16; v5e has no bf16 VALU so promote there.  f32 inputs use f32 params.
    if x.dtype == jnp.bfloat16 and not is_v5e:
        param_dtype = jnp.bfloat16
    else:
        param_dtype = jnp.float32
    w_param = weight.astype(param_dtype)
    b_param = bias.astype(param_dtype)
    p_size = jnp.dtype(param_dtype).itemsize

    # ---- layout: flatten leading dims; make the last dim lane-dense ----
    x2 = x.reshape(-1, H)
    N = x2.shape[0]

    repacked = False
    if H % _LANE != 0:
        # Fold rows into lanes using L = lcm(H, 128).  Lane c of the repacked
        # layout holds feature (c % H) because L is a multiple of H, so tiling
        # weight/bias L/H times reproduces the same affine while giving an
        # unmasked, lane-dense output store (no vst.msk partial stores).
        L = math.lcm(H, _LANE)
        if L <= _MAX_REPACK_LANES and (N * H) % L == 0:
            rep = L // H
            H_eff = L
            N_eff = (N * H) // L
            x2 = x2.reshape(N_eff, H_eff)
            w2 = jnp.tile(w_param, rep).reshape(1, H_eff)
            b2 = jnp.tile(b_param, rep).reshape(1, H_eff)
            repacked = True
    if not repacked:
        # TODO(synk): for large H that is neither a multiple of 128 nor
        # repackable, padding H up to a lane multiple would avoid a masked
        # last vreg column.
        H_eff, N_eff = H, N
        w2 = w_param.reshape(1, H)
        b2 = b_param.reshape(1, H)

    # ---- tile selection: the VMEM byte budget is the only binding cap ----
    if H_eff % _LANE == 0 and H_eff > _MAX_TN:
        tn = _MAX_TN                      # column tiling only for very large H
    else:
        tn = H_eff                        # full extent of the last dim

    tm = block_budget // max(tn * dsize, 1)
    tm = max(_SUBLANE, (tm // _SUBLANE) * _SUBLANE)
    if tm >= N_eff:
        if N_eff >= 2 * _SUBLANE:
            # Keep >=2 row blocks so the "parallel" row axis can be sharded
            # across v7x's 2 TensorCores.  Free on 1-TC chips.
            half = (N_eff + 1) // 2
            tm = ((half + _SUBLANE - 1) // _SUBLANE) * _SUBLANE
        else:
            tm = N_eff                    # tiny input: single full-extent block

    grid_rows = pl.cdiv(N_eff, tm)
    grid_cols = pl.cdiv(H_eff, tn)

    if grid_cols == 1:
        grid = (grid_rows,)
        x_spec = pl.BlockSpec((tm, tn), lambda i: (i, 0))
        o_spec = pl.BlockSpec((tm, tn), lambda i: (i, 0))
        # Whole-array params resident in VMEM: no per-step param DMA / buffers.
        p_spec = pl.BlockSpec(memory_space=pltpu.MemorySpace.VMEM)
        dim_sem = ("parallel",)
        param_vmem = 2 * H_eff * p_size
    else:
        grid = (grid_rows, grid_cols)
        x_spec = pl.BlockSpec((tm, tn), lambda i, j: (i, j))
        o_spec = pl.BlockSpec((tm, tn), lambda i, j: (i, j))
        p_spec = pl.BlockSpec((1, tn), lambda i, j: (0, j))
        dim_sem = ("parallel", "parallel")
        param_vmem = 2 * 2 * tn * p_size          # double-buffered param tiles

    # ---- VMEM limit from actual double-buffered footprint + a little slack ----
    block_bytes = tm * tn * dsize
    footprint = 4 * block_bytes + param_vmem      # 2 x-bufs + 2 out-bufs + params
    cap = (40 * _MIB) if is_small_vmem else (100 * _MIB)
    vmem_limit = int(min(max(footprint + 8 * _MIB, 16 * _MIB), cap))

    cost = pl.CostEstimate(
        flops=2 * N_eff * H_eff,
        transcendentals=0,
        bytes_accessed=2 * N_eff * H_eff * dsize + 2 * H_eff * p_size,
    )

    out = pl.pallas_call(
        _scale_offset_kernel,
        out_shape=jax.ShapeDtypeStruct((N_eff, H_eff), x.dtype),
        grid_spec=pltpu.PrefetchScalarGridSpec(
            num_scalar_prefetch=0,
            grid=grid,
            in_specs=[x_spec, p_spec, p_spec],
            out_specs=o_spec,
        ),
        compiler_params=pltpu.CompilerParams(
            dimension_semantics=dim_sem,
            vmem_limit_bytes=vmem_limit,
        ),
        cost_estimate=cost,
    )(x2, w2, b2)

    return out.reshape(orig_shape)


if __name__ == "__main__":
    key = jax.random.PRNGKey(0)
    keys = jax.random.split(key, 9)

    def _check(shape, dtype, kx, kw, kb):
        H = shape[-1]
        x = jax.random.normal(kx, shape, dtype=jnp.float32).astype(dtype)
        # Module defaults: weight=ones(H), bias=zeros(H); perturb so the affine
        # is actually exercised.
        weight = jnp.ones((H,), jnp.float32) + 0.1 * jax.random.normal(
            kw, (H,), jnp.float32)
        bias = jnp.zeros((H,), jnp.float32) + 0.1 * jax.random.normal(
            kb, (H,), jnp.float32)

        y = jax.block_until_ready(scale_offset(x, weight, bias))
        y_ref = (x.astype(jnp.float32) * weight + bias).astype(dtype)
        tol = 1e-6 if dtype == jnp.float32 else 2e-2
        assert jnp.allclose(
            y.astype(jnp.float32), y_ref.astype(jnp.float32),
            atol=tol, rtol=tol), f"mismatch vs reference for {shape} {dtype}"

    # Primary small shape implied by the module (batch, seq, hidden).
    _check((2, 8, 32), jnp.float32, keys[0], keys[1], keys[2])     # H | 128 repack
    _check((2, 8, 96), jnp.float32, keys[3], keys[4], keys[5])     # lcm(96,128)=384 repack
    _check((4, 129, 256), jnp.bfloat16, keys[6], keys[7], keys[8])  # >=2 row blocks, partial tail

    print("KERNEL_OK")
</pallas_src>

<mosaic_0001>
module attributes {stable_mosaic.version = 11 : i64} {
  func.func @_scale_offset_kernel(%arg0: i32, %arg1: memref<4x128xf32, #tpu.memory_space<vmem>>, %arg2: memref<1x128xf32, #tpu.memory_space<vmem>>, %arg3: memref<1x128xf32, #tpu.memory_space<vmem>>, %arg4: memref<4x128xf32, #tpu.memory_space<vmem>>) attributes {dimension_semantics = [#tpu.dimension_semantics<parallel>], iteration_bounds = array<i64: 1>, scalar_prefetch = 0 : i64, scratch_operands = 0 : i64, tpu.core_type = #tpu.core_type<tc>, window_params = [{transform_indices = @transform_0, window_bounds = array<i64: 4, 128>}, {pipeline_mode = #tpu.pipeline_mode<synchronous>, transform_indices = @transform_1, window_bounds = array<i64: 1, 128>}, {pipeline_mode = #tpu.pipeline_mode<synchronous>, transform_indices = @transform_2, window_bounds = array<i64: 1, 128>}, {transform_indices = @transform_3, window_bounds = array<i64: 4, 128>}]} {
    %c0 = arith.constant 0 : index
    %c0_0 = arith.constant 0 : index
    %0 = vector.load %arg1[%c0, %c0_0] : memref<4x128xf32, #tpu.memory_space<vmem>>, vector<4x128xf32>
    %c0_1 = arith.constant 0 : index
    %c0_2 = arith.constant 0 : index
    %1 = vector.load %arg2[%c0_1, %c0_2] : memref<1x128xf32, #tpu.memory_space<vmem>>, vector<1x128xf32>
    %2 = vector.broadcast %1 : vector<1x128xf32> to vector<4x128xf32>
    %3 = arith.mulf %0, %2 : vector<4x128xf32>
    %c0_3 = arith.constant 0 : index
    %c0_4 = arith.constant 0 : index
    %4 = vector.load %arg3[%c0_3, %c0_4] : memref<1x128xf32, #tpu.memory_space<vmem>>, vector<1x128xf32>
    %5 = vector.broadcast %4 : vector<1x128xf32> to vector<4x128xf32>
    %6 = arith.addf %3, %5 : vector<4x128xf32>
    %c0_5 = arith.constant 0 : index
    %c0_6 = arith.constant 0 : index
    %7 = vector.load %arg4[%c0_5, %c0_6] : memref<4x128xf32, #tpu.memory_space<vmem>>, vector<4x128xf32>
    tpu.vector_store %arg4[%c0_5, %c0_6], %6 {strides = array<i32>} : memref<4x128xf32, #tpu.memory_space<vmem>>, vector<4x128xf32>,
    return
  }
  func.func @transform_0(%arg0: i32) -> (i32, i32) {
    %c0_i32 = arith.constant 0 : i32
    %c0_i32_0 = arith.constant 0 : i32
    return %arg0, %c0_i32 : i32, i32
  }
  func.func @transform_1(%arg0: i32) -> (i32, i32) {
    %c0_i32 = arith.constant 0 : i32
    %c0_i32_0 = arith.constant 0 : i32
    %c0_i32_1 = arith.constant 0 : i32
    return %c0_i32, %c0_i32_0 : i32, i32
  }
  func.func @transform_2(%arg0: i32) -> (i32, i32) {
    %c0_i32 = arith.constant 0 : i32
    %c0_i32_0 = arith.constant 0 : i32
    %c0_i32_1 = arith.constant 0 : i32
    return %c0_i32, %c0_i32_0 : i32, i32
  }
  func.func @transform_3(%arg0: i32) -> (i32, i32) {
    %c0_i32 = arith.constant 0 : i32
    %c0_i32_0 = arith.constant 0 : i32
    return %arg0, %c0_i32 : i32, i32
  }
}

</mosaic_0001>

<llo_original>
// kernel: tpu_custom_call.1
$region0: #{tpu_custom_call.1}
  #allocation0 [shape = 'u32[]', space=smem, size = 0x4, offset = 0x4, fixed_abs, tag = 'smem constant byte address 0x4 - core index']
  #allocation1 [shape = 'u32[144,128]{1,0:T(1,128)}', space=vmem, size = 0x12000, scoped, tag = 'internal scratch']
  %s0 = inlined_call_operand.hbm [shape: f32[4,128], index: 0, kind: input, shape index: {}]
  %s1 = inlined_call_operand.vmem [shape: f32[1,128], index: 1, kind: input, shape index: {}]
  %s2 = inlined_call_operand.vmem [shape: f32[1,128], index: 2, kind: input, shape index: {}]
  %s3 = inlined_call_operand.hbm [shape: f32[4,128], index: 3, kind: output, shape index: {}]
  %s4 = sld [smem:[#allocation0]]
  $region26: #{tpu_custom_call.1} parent=0
    _
  %s6 = ssub.s32 1, %s4
  %s7 = scalar_select 0, %s6, %s4
  $region1: #{tpu_custom_call.1} parent=0
    #allocation2 [shape = 'u8[2048]{0}', space=vmem, size = 0x800, scoped, tag = 'input window, operand 0, single buffered']
    #allocation3 [shape = 's32[1]{0}', space=sflag, size = 0x4, scoped, tag = 'scoped memory for tpu_custom_call.1']
    #allocation4 [shape = 's32[1]{0}', space=sflag, size = 0x4, scoped, tag = 'scoped memory for tpu_custom_call.1']
    #allocation5 [shape = 'u8[2048]{0}', space=vmem, size = 0x800, scoped, tag = 'output window, operand 0, single buffered']
    %8 = vsyncpa [#allocation3], 0
    %9 = vsyncpa [#allocation4], 0
    // Predicated region
    $region2: #{tpu_custom_call.1} parent=1 // pred_check
      _
    $region3: #{tpu_custom_call.1} parent=1 // pred_check_branch
      %11 = sbr.rel (0) target = $region5
    $region4: #{tpu_custom_call.1} parent=1 // pred_region
      %s13 = ssub.s32 64, 64
      %14 = vsyncadd [#allocation3], %s13
      %s16 = sshll.u32 [#allocation2], 4
      %s17 = int_to_ptr.vmem [resolvable:$true] %s16
      %19 = dma.hbm_to_vmem [thread:$0]  %s0, 64, %s17, [#allocation3]
    $region5: #{tpu_custom_call.1} parent=1 // pred_fallthru
      _
    // Predicated region
    $region6: #{tpu_custom_call.1} parent=1 // pred_check
      _
    $region7: #{tpu_custom_call.1} parent=1 // pred_check_branch
      %21 = sbr.rel (0) target = $region9
    $region8: #{tpu_custom_call.1} parent=1 // pred_region
      _
    $region9: #{tpu_custom_call.1} parent=1 // pred_fallthru
      _
    // Predicated region
    $region10: #{tpu_custom_call.1} parent=1 // pred_check
      _
    $region11: #{tpu_custom_call.1} parent=1 // pred_check_branch
      %23 = sbr.rel (0) target = $region13
    $region12: #{tpu_custom_call.1} parent=1 // pred_region
      _
    $region13: #{tpu_custom_call.1} parent=1 // pred_fallthru
      _
    // Predicated region
    $region14: #{tpu_custom_call.1} parent=1 // pred_check
      _
    $region15: #{tpu_custom_call.1} parent=1 // pred_check_branch
      %25 = sbr.rel (0) target = $region17
    $region16: #{tpu_custom_call.1} parent=1 // pred_region
      %26 = dma.done [#allocation3], 64
    $region17: #{tpu_custom_call.1} parent=1 // pred_fallthru
      _
    %v27 = vld [vmem:[#allocation2] sm:$0xf]
    %v28 = vld [vmem:[%s1] sm:$0x1]
    %v30 = vlaneseq
    %v31 = vshrl.u32 %v30, 7
    %v32 = vsub.s32 0, %v31
    %v33 = vrot.slane %v28, %v32
    %v35 = vmul.f32 %v27, %v33
    %v36 = vld [vmem:[%s2] sm:$0x1]
    %v38 = vlaneseq
    %v39 = vshrl.u32 %v38, 7
    %v40 = vsub.s32 0, %v39
    %v41 = vrot.slane %v36, %v40
    %v43 = vadd.f32 %v35, %v41
    %44 = vst [vmem:[#allocation5] sm:$0xf] %v43
    // Predicated region
    $region18: #{tpu_custom_call.1} parent=1 // pred_check
      _
    $region19: #{tpu_custom_call.1} parent=1 // pred_check_branch
      %46 = sbr.rel (0) target = $region21
    $region20: #{tpu_custom_call.1} parent=1 // pred_region
      %s48 = ssub.s32 64, 64
      %49 = vsyncadd [#allocation4], %s48
      %s51 = sshll.u32 [#allocation5], 4
      %s52 = int_to_ptr.vmem [resolvable:$true] %s51
      %54 = dma.vmem_to_hbm [thread:$0]  %s52, 64, %s3, [#allocation4]
    $region21: #{tpu_custom_call.1} parent=1 // pred_fallthru
      _
    // Predicated region
    $region22: #{tpu_custom_call.1} parent=1 // pred_check
      _
    $region23: #{tpu_custom_call.1} parent=1 // pred_check_branch
      %56 = sbr.rel (0) target = $region25
    $region24: #{tpu_custom_call.1} parent=1 // pred_region
      %57 = dma.done [#allocation4], 64
    $region25: #{tpu_custom_call.1} parent=1 // pred_fallthru
      _
    %58 = vsyncpa [#allocation3], 1
    %59 = vsyncpa [#allocation4], 1

</llo_original>
